<compile_context>
chip_gen: v6e
topology: v6e:2x2x1
jax: 0.10.0
libtpu: 0.0.40
codegen_flags: <defaults>
</compile_context>

<pallas_src>
import jax
import jax.numpy as jnp
from jax.experimental import pallas as pl
from jax.experimental.pallas import tpu as pltpu


def lstm_forward(x, w_ih_t, w_hh_t, b, w_dec_t, b_dec):
    """x: (seq, batch, input_size) f32. Returns (batch, label_size) logits.

    w_ih_t: (D, 4H)   w_hh_t: (H, 4H)   b: (1, 4H) = b_ih + b_hh
    w_dec_t: (H, L)   b_dec: (1, L)
    """
    seq_len, batch, in_dim = x.shape
    hidden = w_hh_t.shape[0]
    label = w_dec_t.shape[1]

    # Lane-pad the decoder so the kernel's only output store is a full-width,
    # unmasked vst (lane-dense output is the biggest single lever for tiny outputs).
    out_pad = max(128, ((label + 127) // 128) * 128)
    w_dec_pad = jnp.zeros((hidden, out_pad), jnp.float32).at[:, :label].set(w_dec_t)
    b_dec_pad = jnp.zeros((1, out_pad), jnp.float32).at[:, :label].set(b_dec)

    # Flatten time*batch so the input projection is one batched matmul.
    x2d = x.reshape(seq_len * batch, in_dim)

    def kernel(x_ref, w_ih_ref, w_hh_ref, b_ref, w_dec_ref, b_dec_ref, out_ref):
        H = hidden
        # Hoisted input projection: one MXU matmul for ALL timesteps (+ bias).
        xg = (jnp.dot(x_ref[...], w_ih_ref[...],
                      preferred_element_type=jnp.float32)
              + b_ref[...])                                  # (seq*B, 4H)

        w_hh = w_hh_ref[...]                                 # load once, reuse

        h = jnp.zeros((batch, H), jnp.float32)
        c = jnp.zeros((batch, H), jnp.float32)

        # Statically unrolled recurrence: per step only h @ W_hh^T hits the MXU;
        # LLO gets full cross-timestep visibility for overlap.  Gate slices are
        # 32-lane sub-vreg extracts (a few XLU rotates per step) — negligible at
        # 4H=128 next to the MXU/EUP chain.
        for t in range(seq_len):
            gates = (jnp.dot(h, w_hh, preferred_element_type=jnp.float32)
                     + xg[t * batch:(t + 1) * batch, :])     # (B, 4H)
            # PyTorch gate order: i, f, g, o
            i = jax.nn.sigmoid(gates[:, 0 * H:1 * H])
            f = jax.nn.sigmoid(gates[:, 1 * H:2 * H])
            g = jnp.tanh(gates[:, 2 * H:3 * H])
            o = jax.nn.sigmoid(gates[:, 3 * H:4 * H])
            c = f * c + i * g
            h = o * jnp.tanh(c)

        # decoder applied to states[-1] (== h_T), lane-padded -> unmasked store.
        out_ref[...] = (jnp.dot(h, w_dec_ref[...],
                                preferred_element_type=jnp.float32)
                        + b_dec_ref[...])

    out_padded = pl.pallas_call(
        kernel,
        out_shape=jax.ShapeDtypeStruct((batch, out_pad), jnp.float32),
        # Single invocation, no grid: every operand is copied to VMEM exactly
        # once (whole-array blocks), no pipeline/double-buffer bookkeeping.
        in_specs=[pl.BlockSpec(memory_space=pltpu.MemorySpace.VMEM)] * 6,
        out_specs=pl.BlockSpec(memory_space=pltpu.MemorySpace.VMEM),
    )(x2d, w_ih_t, w_hh_t, b, w_dec_pad, b_dec_pad)

    return out_padded[:, :label]


def reference_forward(x, w_ih_t, w_hh_t, b, w_dec_t, b_dec):
    """Pure-JAX reference of the same recurrence (for verification)."""
    H = w_hh_t.shape[0]

    def step(carry, x_t):
        h, c = carry
        gates = x_t @ w_ih_t + h @ w_hh_t + b
        i = jax.nn.sigmoid(gates[:, 0 * H:1 * H])
        f = jax.nn.sigmoid(gates[:, 1 * H:2 * H])
        g = jnp.tanh(gates[:, 2 * H:3 * H])
        o = jax.nn.sigmoid(gates[:, 3 * H:4 * H])
        c = f * c + i * g
        h = o * jnp.tanh(c)
        return (h, c), h

    h0 = jnp.zeros((x.shape[1], H), jnp.float32)
    (h, _), _ = jax.lax.scan(step, (h0, h0), x)
    return h @ w_dec_t + b_dec


if __name__ == "__main__":
    # ----- small, deterministic problem sizes -----
    VOCAB_SIZE = 50
    EMBEDDING_DIM = INPUT_SIZE = 16
    HIDDEN_SIZE = 32
    LABEL_SIZE = 4
    SEQ_LEN = 8
    BATCH = 1  # PyTorch forward uses unsqueeze(1) -> batch of 1

    key = jax.random.PRNGKey(0)
    ks = jax.random.split(key, 8)

    # nn.Embedding weight (stands in for VOCAB.vectors)
    emb_table = jax.random.normal(ks[0], (VOCAB_SIZE, EMBEDDING_DIM),
                                  jnp.float32)

    # nn.LSTM params (PyTorch init: U(-1/sqrt(H), 1/sqrt(H)))
    s = 1.0 / jnp.sqrt(HIDDEN_SIZE)
    w_ih = jax.random.uniform(ks[1], (4 * HIDDEN_SIZE, INPUT_SIZE),
                              jnp.float32, -s, s)
    w_hh = jax.random.uniform(ks[2], (4 * HIDDEN_SIZE, HIDDEN_SIZE),
                              jnp.float32, -s, s)
    b_ih = jax.random.uniform(ks[3], (4 * HIDDEN_SIZE,), jnp.float32, -s, s)
    b_hh = jax.random.uniform(ks[4], (4 * HIDDEN_SIZE,), jnp.float32, -s, s)

    # nn.Linear decoder params
    w_dec = jax.random.uniform(ks[5], (LABEL_SIZE, HIDDEN_SIZE),
                               jnp.float32, -s, s)
    b_dec = jax.random.uniform(ks[6], (LABEL_SIZE,), jnp.float32, -s, s)

    # token ids (stand-in for [TEXT_VOCAB.stoi[t] for t in sentence])
    token_ids = jax.random.randint(ks[7], (SEQ_LEN,), 0, VOCAB_SIZE)

    # embedding gather (glue, plain JAX) -> (seq, 1, emb_dim)
    embeddings = emb_table[token_ids][:, None, :]

    # pre-transpose weights for row-major matmuls inside the kernel
    w_ih_t = w_ih.T                                   # (D, 4H)
    w_hh_t = w_hh.T                                   # (H, 4H)
    b_comb = (b_ih + b_hh)[None, :]                   # (1, 4H)
    w_dec_t = w_dec.T                                 # (H, L)
    b_dec_r = b_dec[None, :]                          # (1, L)

    out = lstm_forward(embeddings, w_ih_t, w_hh_t, b_comb, w_dec_t, b_dec_r)
    out = jax.block_until_ready(out)

    ref = reference_forward(embeddings, w_ih_t, w_hh_t, b_comb,
                            w_dec_t, b_dec_r)
    assert out.shape == (BATCH, LABEL_SIZE)
    assert jnp.allclose(out, ref, atol=1e-5, rtol=1e-5), (out, ref)

    print("KERNEL_OK")
</pallas_src>

<mosaic_0001>
module attributes {stable_mosaic.version = 11 : i64} {
  func.func @kernel(%arg0: memref<8x16xf32, #tpu.memory_space<vmem>>, %arg1: memref<16x128xf32, #tpu.memory_space<vmem>>, %arg2: memref<32x128xf32, #tpu.memory_space<vmem>>, %arg3: memref<1x128xf32, #tpu.memory_space<vmem>>, %arg4: memref<32x128xf32, #tpu.memory_space<vmem>>, %arg5: memref<1x128xf32, #tpu.memory_space<vmem>>, %arg6: memref<1x128xf32, #tpu.memory_space<vmem>>) attributes {dimension_semantics = [], scalar_prefetch = 0 : i64, scratch_operands = 0 : i64, tpu.core_type = #tpu.core_type<tc>} {
    %c0 = arith.constant 0 : index
    %c0_0 = arith.constant 0 : index
    %0 = vector.load %arg0[%c0, %c0_0] : memref<8x16xf32, #tpu.memory_space<vmem>>, vector<8x16xf32>
    %c0_1 = arith.constant 0 : index
    %c0_2 = arith.constant 0 : index
    %1 = vector.load %arg1[%c0_1, %c0_2] : memref<16x128xf32, #tpu.memory_space<vmem>>, vector<16x128xf32>
    %cst = arith.constant dense<0.000000e+00> : vector<8x128xf32>
    %2 = tpu.matmul %0, %1, %cst {dimension_numbers = #tpu.dot_dimension_numbers<[1], [0], [0], [1], [0, 0, 1, 1], [], []>} : vector<8x16xf32>, vector<16x128xf32>, vector<8x128xf32> -> vector<8x128xf32>
    %c0_3 = arith.constant 0 : index
    %c0_4 = arith.constant 0 : index
    %3 = vector.load %arg3[%c0_3, %c0_4] : memref<1x128xf32, #tpu.memory_space<vmem>>, vector<1x128xf32>
    %4 = vector.broadcast %3 : vector<1x128xf32> to vector<8x128xf32>
    %5 = arith.addf %2, %4 : vector<8x128xf32>
    %c0_5 = arith.constant 0 : index
    %c0_6 = arith.constant 0 : index
    %6 = vector.load %arg2[%c0_5, %c0_6] : memref<32x128xf32, #tpu.memory_space<vmem>>, vector<32x128xf32>
    %cst_7 = arith.constant 0.000000e+00 : f32
    %7 = vector.broadcast %cst_7 : f32 to vector<1x32xf32>
    %cst_8 = arith.constant 0.000000e+00 : f32
    %8 = vector.broadcast %cst_8 : f32 to vector<1x32xf32>
    %cst_9 = arith.constant dense<0.000000e+00> : vector<1x128xf32>
    %9 = tpu.matmul %7, %6, %cst_9 {dimension_numbers = #tpu.dot_dimension_numbers<[1], [0], [0], [1], [0, 0, 1, 1], [], []>} : vector<1x32xf32>, vector<32x128xf32>, vector<1x128xf32> -> vector<1x128xf32>
    %10 = vector.extract_strided_slice %5 {offsets = [0, 0], sizes = [1, 128], strides = [1, 1]} : vector<8x128xf32> to vector<1x128xf32>
    %11 = arith.addf %9, %10 : vector<1x128xf32>
    %12 = vector.extract_strided_slice %11 {offsets = [0, 0], sizes = [1, 32], strides = [1, 1]} : vector<1x128xf32> to vector<1x32xf32>
    %13 = arith.negf %12 : vector<1x32xf32>
    %14 = math.exp %13 : vector<1x32xf32>
    %cst_10 = arith.constant 1.000000e+00 : f32
    %15 = vector.broadcast %cst_10 : f32 to vector<1x32xf32>
    %16 = arith.addf %15, %14 : vector<1x32xf32>
    %17 = arith.divf %15, %16 : vector<1x32xf32>
    %18 = vector.extract_strided_slice %11 {offsets = [0, 32], sizes = [1, 32], strides = [1, 1]} : vector<1x128xf32> to vector<1x32xf32>
    %19 = arith.negf %18 : vector<1x32xf32>
    %20 = math.exp %19 : vector<1x32xf32>
    %cst_11 = arith.constant 1.000000e+00 : f32
    %21 = vector.broadcast %cst_11 : f32 to vector<1x32xf32>
    %22 = arith.addf %21, %20 : vector<1x32xf32>
    %23 = arith.divf %21, %22 : vector<1x32xf32>
    %24 = vector.extract_strided_slice %11 {offsets = [0, 64], sizes = [1, 32], strides = [1, 1]} : vector<1x128xf32> to vector<1x32xf32>
    %25 = math.tanh %24 : vector<1x32xf32>
    %26 = vector.extract_strided_slice %11 {offsets = [0, 96], sizes = [1, 32], strides = [1, 1]} : vector<1x128xf32> to vector<1x32xf32>
    %27 = arith.negf %26 : vector<1x32xf32>
    %28 = math.exp %27 : vector<1x32xf32>
    %cst_12 = arith.constant 1.000000e+00 : f32
    %29 = vector.broadcast %cst_12 : f32 to vector<1x32xf32>
    %30 = arith.addf %29, %28 : vector<1x32xf32>
    %31 = arith.divf %29, %30 : vector<1x32xf32>
    %32 = arith.mulf %23, %8 : vector<1x32xf32>
    %33 = arith.mulf %17, %25 : vector<1x32xf32>
    %34 = arith.addf %32, %33 : vector<1x32xf32>
    %35 = math.tanh %34 : vector<1x32xf32>
    %36 = arith.mulf %31, %35 : vector<1x32xf32>
    %cst_13 = arith.constant dense<0.000000e+00> : vector<1x128xf32>
    %37 = tpu.matmul %36, %6, %cst_13 {dimension_numbers = #tpu.dot_dimension_numbers<[1], [0], [0], [1], [0, 0, 1, 1], [], []>} : vector<1x32xf32>, vector<32x128xf32>, vector<1x128xf32> -> vector<1x128xf32>
    %38 = vector.extract_strided_slice %5 {offsets = [1, 0], sizes = [1, 128], strides = [1, 1]} : vector<8x128xf32> to vector<1x128xf32>
    %39 = arith.addf %37, %38 : vector<1x128xf32>
    %40 = vector.extract_strided_slice %39 {offsets = [0, 0], sizes = [1, 32], strides = [1, 1]} : vector<1x128xf32> to vector<1x32xf32>
    %41 = arith.negf %40 : vector<1x32xf32>
    %42 = math.exp %41 : vector<1x32xf32>
    %cst_14 = arith.constant 1.000000e+00 : f32
    %43 = vector.broadcast %cst_14 : f32 to vector<1x32xf32>
    %44 = arith.addf %43, %42 : vector<1x32xf32>
    %45 = arith.divf %43, %44 : vector<1x32xf32>
    %46 = vector.extract_strided_slice %39 {offsets = [0, 32], sizes = [1, 32], strides = [1, 1]} : vector<1x128xf32> to vector<1x32xf32>
    %47 = arith.negf %46 : vector<1x32xf32>
    %48 = math.exp %47 : vector<1x32xf32>
    %cst_15 = arith.constant 1.000000e+00 : f32
    %49 = vector.broadcast %cst_15 : f32 to vector<1x32xf32>
    %50 = arith.addf %49, %48 : vector<1x32xf32>
    %51 = arith.divf %49, %50 : vector<1x32xf32>
    %52 = vector.extract_strided_slice %39 {offsets = [0, 64], sizes = [1, 32], strides = [1, 1]} : vector<1x128xf32> to vector<1x32xf32>
    %53 = math.tanh %52 : vector<1x32xf32>
    %54 = vector.extract_strided_slice %39 {offsets = [0, 96], sizes = [1, 32], strides = [1, 1]} : vector<1x128xf32> to vector<1x32xf32>
    %55 = arith.negf %54 : vector<1x32xf32>
    %56 = math.exp %55 : vector<1x32xf32>
    %cst_16 = arith.constant 1.000000e+00 : f32
    %57 = vector.broadcast %cst_16 : f32 to vector<1x32xf32>
    %58 = arith.addf %57, %56 : vector<1x32xf32>
    %59 = arith.divf %57, %58 : vector<1x32xf32>
    %60 = arith.mulf %51, %34 : vector<1x32xf32>
    %61 = arith.mulf %45, %53 : vector<1x32xf32>
    %62 = arith.addf %60, %61 : vector<1x32xf32>
    %63 = math.tanh %62 : vector<1x32xf32>
    %64 = arith.mulf %59, %63 : vector<1x32xf32>
    %cst_17 = arith.constant dense<0.000000e+00> : vector<1x128xf32>
    %65 = tpu.matmul %64, %6, %cst_17 {dimension_numbers = #tpu.dot_dimension_numbers<[1], [0], [0], [1], [0, 0, 1, 1], [], []>} : vector<1x32xf32>, vector<32x128xf32>, vector<1x128xf32> -> vector<1x128xf32>
    %66 = vector.extract_strided_slice %5 {offsets = [2, 0], sizes = [1, 128], strides = [1, 1]} : vector<8x128xf32> to vector<1x128xf32>
    %67 = arith.addf %65, %66 : vector<1x128xf32>
    %68 = vector.extract_strided_slice %67 {offsets = [0, 0], sizes = [1, 32], strides = [1, 1]} : vector<1x128xf32> to vector<1x32xf32>
    %69 = arith.negf %68 : vector<1x32xf32>
    %70 = math.exp %69 : vector<1x32xf32>
    %cst_18 = arith.constant 1.000000e+00 : f32
    %71 = vector.broadcast %cst_18 : f32 to vector<1x32xf32>
    %72 = arith.addf %71, %70 : vector<1x32xf32>
    %73 = arith.divf %71, %72 : vector<1x32xf32>
    %74 = vector.extract_strided_slice %67 {offsets = [0, 32], sizes = [1, 32], strides = [1, 1]} : vector<1x128xf32> to vector<1x32xf32>
    %75 = arith.negf %74 : vector<1x32xf32>
    %76 = math.exp %75 : vector<1x32xf32>
    %cst_19 = arith.constant 1.000000e+00 : f32
    %77 = vector.broadcast %cst_19 : f32 to vector<1x32xf32>
    %78 = arith.addf %77, %76 : vector<1x32xf32>
    %79 = arith.divf %77, %78 : vector<1x32xf32>
    %80 = vector.extract_strided_slice %67 {offsets = [0, 64], sizes = [1, 32], strides = [1, 1]} : vector<1x128xf32> to vector<1x32xf32>
    %81 = math.tanh %80 : vector<1x32xf32>
    %82 = vector.extract_strided_slice %67 {offsets = [0, 96], sizes = [1, 32], strides = [1, 1]} : vector<1x128xf32> to vector<1x32xf32>
    %83 = arith.negf %82 : vector<1x32xf32>
    %84 = math.exp %83 : vector<1x32xf32>
    %cst_20 = arith.constant 1.000000e+00 : f32
    %85 = vector.broadcast %cst_20 : f32 to vector<1x32xf32>
    %86 = arith.addf %85, %84 : vector<1x32xf32>
    %87 = arith.divf %85, %86 : vector<1x32xf32>
    %88 = arith.mulf %79, %62 : vector<1x32xf32>
    %89 = arith.mulf %73, %81 : vector<1x32xf32>
    %90 = arith.addf %88, %89 : vector<1x32xf32>
    %91 = math.tanh %90 : vector<1x32xf32>
    %92 = arith.mulf %87, %91 : vector<1x32xf32>
    %cst_21 = arith.constant dense<0.000000e+00> : vector<1x128xf32>
    %93 = tpu.matmul %92, %6, %cst_21 {dimension_numbers = #tpu.dot_dimension_numbers<[1], [0], [0], [1], [0, 0, 1, 1], [], []>} : vector<1x32xf32>, vector<32x128xf32>, vector<1x128xf32> -> vector<1x128xf32>
    %94 = vector.extract_strided_slice %5 {offsets = [3, 0], sizes = [1, 128], strides = [1, 1]} : vector<8x128xf32> to vector<1x128xf32>
    %95 = arith.addf %93, %94 : vector<1x128xf32>
    %96 = vector.extract_strided_slice %95 {offsets = [0, 0], sizes = [1, 32], strides = [1, 1]} : vector<1x128xf32> to vector<1x32xf32>
    %97 = arith.negf %96 : vector<1x32xf32>
    %98 = math.exp %97 : vector<1x32xf32>
    %cst_22 = arith.constant 1.000000e+00 : f32
    %99 = vector.broadcast %cst_22 : f32 to vector<1x32xf32>
    %100 = arith.addf %99, %98 : vector<1x32xf32>
    %101 = arith.divf %99, %100 : vector<1x32xf32>
    %102 = vector.extract_strided_slice %95 {offsets = [0, 32], sizes = [1, 32], strides = [1, 1]} : vector<1x128xf32> to vector<1x32xf32>
    %103 = arith.negf %102 : vector<1x32xf32>
    %104 = math.exp %103 : vector<1x32xf32>
    %cst_23 = arith.constant 1.000000e+00 : f32
    %105 = vector.broadcast %cst_23 : f32 to vector<1x32xf32>
    %106 = arith.addf %105, %104 : vector<1x32xf32>
    %107 = arith.divf %105, %106 : vector<1x32xf32>
    %108 = vector.extract_strided_slice %95 {offsets = [0, 64], sizes = [1, 32], strides = [1, 1]} : vector<1x128xf32> to vector<1x32xf32>
    %109 = math.tanh %108 : vector<1x32xf32>
    %110 = vector.extract_strided_slice %95 {offsets = [0, 96], sizes = [1, 32], strides = [1, 1]} : vector<1x128xf32> to vector<1x32xf32>
    %111 = arith.negf %110 : vector<1x32xf32>
    %112 = math.exp %111 : vector<1x32xf32>
    %cst_24 = arith.constant 1.000000e+00 : f32
    %113 = vector.broadcast %cst_24 : f32 to vector<1x32xf32>
    %114 = arith.addf %113, %112 : vector<1x32xf32>
    %115 = arith.divf %113, %114 : vector<1x32xf32>
    %116 = arith.mulf %107, %90 : vector<1x32xf32>
    %117 = arith.mulf %101, %109 : vector<1x32xf32>
    %118 = arith.addf %116, %117 : vector<1x32xf32>
    %119 = math.tanh %118 : vector<1x32xf32>
    %120 = arith.mulf %115, %119 : vector<1x32xf32>
    %cst_25 = arith.constant dense<0.000000e+00> : vector<1x128xf32>
    %121 = tpu.matmul %120, %6, %cst_25 {dimension_numbers = #tpu.dot_dimension_numbers<[1], [0], [0], [1], [0, 0, 1, 1], [], []>} : vector<1x32xf32>, vector<32x128xf32>, vector<1x128xf32> -> vector<1x128xf32>
    %122 = vector.extract_strided_slice %5 {offsets = [4, 0], sizes = [1, 128], strides = [1, 1]} : vector<8x128xf32> to vector<1x128xf32>
    %123 = arith.addf %121, %122 : vector<1x128xf32>
    %124 = vector.extract_strided_slice %123 {offsets = [0, 0], sizes = [1, 32], strides = [1, 1]} : vector<1x128xf32> to vector<1x32xf32>
    %125 = arith.negf %124 : vector<1x32xf32>
    %126 = math.exp %125 : vector<1x32xf32>
    %cst_26 = arith.constant 1.000000e+00 : f32
    %127 = vector.broadcast %cst_26 : f32 to vector<1x32xf32>
    %128 = arith.addf %127, %126 : vector<1x32xf32>
    %129 = arith.divf %127, %128 : vector<1x32xf32>
    %130 = vector.extract_strided_slice %123 {offsets = [0, 32], sizes = [1, 32], strides = [1, 1]} : vector<1x128xf32> to vector<1x32xf32>
    %131 = arith.negf %130 : vector<1x32xf32>
    %132 = math.exp %131 : vector<1x32xf32>
    %cst_27 = arith.constant 1.000000e+00 : f32
    %133 = vector.broadcast %cst_27 : f32 to vector<1x32xf32>
    %134 = arith.addf %133, %132 : vector<1x32xf32>
    %135 = arith.divf %133, %134 : vector<1x32xf32>
    %136 = vector.extract_strided_slice %123 {offsets = [0, 64], sizes = [1, 32], strides = [1, 1]} : vector<1x128xf32> to vector<1x32xf32>
    %137 = math.tanh %136 : vector<1x32xf32>
    %138 = vector.extract_strided_slice %123 {offsets = [0, 96], sizes = [1, 32], strides = [1, 1]} : vector<1x128xf32> to vector<1x32xf32>
    %139 = arith.negf %138 : vector<1x32xf32>
    %140 = math.exp %139 : vector<1x32xf32>
    %cst_28 = arith.constant 1.000000e+00 : f32
    %141 = vector.broadcast %cst_28 : f32 to vector<1x32xf32>
    %142 = arith.addf %141, %140 : vector<1x32xf32>
    %143 = arith.divf %141, %142 : vector<1x32xf32>
    %144 = arith.mulf %135, %118 : vector<1x32xf32>
    %145 = arith.mulf %129, %137 : vector<1x32xf32>
    %146 = arith.addf %144, %145 : vector<1x32xf32>
    %147 = math.tanh %146 : vector<1x32xf32>
    %148 = arith.mulf %143, %147 : vector<1x32xf32>
    %cst_29 = arith.constant dense<0.000000e+00> : vector<1x128xf32>
    %149 = tpu.matmul %148, %6, %cst_29 {dimension_numbers = #tpu.dot_dimension_numbers<[1], [0], [0], [1], [0, 0, 1, 1], [], []>} : vector<1x32xf32>, vector<32x128xf32>, vector<1x128xf32> -> vector<1x128xf32>
    %150 = vector.extract_strided_slice %5 {offsets = [5, 0], sizes = [1, 128], strides = [1, 1]} : vector<8x128xf32> to vector<1x128xf32>
    %151 = arith.addf %149, %150 : vector<1x128xf32>
    %152 = vector.extract_strided_slice %151 {offsets = [0, 0], sizes = [1, 32], strides = [1, 1]} : vector<1x128xf32> to vector<1x32xf32>
    %153 = arith.negf %152 : vector<1x32xf32>
    %154 = math.exp %153 : vector<1x32xf32>
    %cst_30 = arith.constant 1.000000e+00 : f32
    %155 = vector.broadcast %cst_30 : f32 to vector<1x32xf32>
    %156 = arith.addf %155, %154 : vector<1x32xf32>
    %157 = arith.divf %155, %156 : vector<1x32xf32>
    %158 = vector.extract_strided_slice %151 {offsets = [0, 32], sizes = [1, 32], strides = [1, 1]} : vector<1x128xf32> to vector<1x32xf32>
    %159 = arith.negf %158 : vector<1x32xf32>
    %160 = math.exp %159 : vector<1x32xf32>
    %cst_31 = arith.constant 1.000000e+00 : f32
    %161 = vector.broadcast %cst_31 : f32 to vector<1x32xf32>
    %162 = arith.addf %161, %160 : vector<1x32xf32>
    %163 = arith.divf %161, %162 : vector<1x32xf32>
    %164 = vector.extract_strided_slice %151 {offsets = [0, 64], sizes = [1, 32], strides = [1, 1]} : vector<1x128xf32> to vector<1x32xf32>
    %165 = math.tanh %164 : vector<1x32xf32>
    %166 = vector.extract_strided_slice %151 {offsets = [0, 96], sizes = [1, 32], strides = [1, 1]} : vector<1x128xf32> to vector<1x32xf32>
    %167 = arith.negf %166 : vector<1x32xf32>
    %168 = math.exp %167 : vector<1x32xf32>
    %cst_32 = arith.constant 1.000000e+00 : f32
    %169 = vector.broadcast %cst_32 : f32 to vector<1x32xf32>
    %170 = arith.addf %169, %168 : vector<1x32xf32>
    %171 = arith.divf %169, %170 : vector<1x32xf32>
    %172 = arith.mulf %163, %146 : vector<1x32xf32>
    %173 = arith.mulf %157, %165 : vector<1x32xf32>
    %174 = arith.addf %172, %173 : vector<1x32xf32>
    %175 = math.tanh %174 : vector<1x32xf32>
    %176 = arith.mulf %171, %175 : vector<1x32xf32>
    %cst_33 = arith.constant dense<0.000000e+00> : vector<1x128xf32>
    %177 = tpu.matmul %176, %6, %cst_33 {dimension_numbers = #tpu.dot_dimension_numbers<[1], [0], [0], [1], [0, 0, 1, 1], [], []>} : vector<1x32xf32>, vector<32x128xf32>, vector<1x128xf32> -> vector<1x128xf32>
    %178 = vector.extract_strided_slice %5 {offsets = [6, 0], sizes = [1, 128], strides = [1, 1]} : vector<8x128xf32> to vector<1x128xf32>
    %179 = arith.addf %177, %178 : vector<1x128xf32>
    %180 = vector.extract_strided_slice %179 {offsets = [0, 0], sizes = [1, 32], strides = [1, 1]} : vector<1x128xf32> to vector<1x32xf32>
    %181 = arith.negf %180 : vector<1x32xf32>
    %182 = math.exp %181 : vector<1x32xf32>
    %cst_34 = arith.constant 1.000000e+00 : f32
    %183 = vector.broadcast %cst_34 : f32 to vector<1x32xf32>
    %184 = arith.addf %183, %182 : vector<1x32xf32>
    %185 = arith.divf %183, %184 : vector<1x32xf32>
    %186 = vector.extract_strided_slice %179 {offsets = [0, 32], sizes = [1, 32], strides = [1, 1]} : vector<1x128xf32> to vector<1x32xf32>
    %187 = arith.negf %186 : vector<1x32xf32>
    %188 = math.exp %187 : vector<1x32xf32>
    %cst_35 = arith.constant 1.000000e+00 : f32
    %189 = vector.broadcast %cst_35 : f32 to vector<1x32xf32>
    %190 = arith.addf %189, %188 : vector<1x32xf32>
    %191 = arith.divf %189, %190 : vector<1x32xf32>
    %192 = vector.extract_strided_slice %179 {offsets = [0, 64], sizes = [1, 32], strides = [1, 1]} : vector<1x128xf32> to vector<1x32xf32>
    %193 = math.tanh %192 : vector<1x32xf32>
    %194 = vector.extract_strided_slice %179 {offsets = [0, 96], sizes = [1, 32], strides = [1, 1]} : vector<1x128xf32> to vector<1x32xf32>
    %195 = arith.negf %194 : vector<1x32xf32>
    %196 = math.exp %195 : vector<1x32xf32>
    %cst_36 = arith.constant 1.000000e+00 : f32
    %197 = vector.broadcast %cst_36 : f32 to vector<1x32xf32>
    %198 = arith.addf %197, %196 : vector<1x32xf32>
    %199 = arith.divf %197, %198 : vector<1x32xf32>
    %200 = arith.mulf %191, %174 : vector<1x32xf32>
    %201 = arith.mulf %185, %193 : vector<1x32xf32>
    %202 = arith.addf %200, %201 : vector<1x32xf32>
    %203 = math.tanh %202 : vector<1x32xf32>
    %204 = arith.mulf %199, %203 : vector<1x32xf32>
    %cst_37 = arith.constant dense<0.000000e+00> : vector<1x128xf32>
    %205 = tpu.matmul %204, %6, %cst_37 {dimension_numbers = #tpu.dot_dimension_numbers<[1], [0], [0], [1], [0, 0, 1, 1], [], []>} : vector<1x32xf32>, vector<32x128xf32>, vector<1x128xf32> -> vector<1x128xf32>
    %206 = vector.extract_strided_slice %5 {offsets = [7, 0], sizes = [1, 128], strides = [1, 1]} : vector<8x128xf32> to vector<1x128xf32>
    %207 = arith.addf %205, %206 : vector<1x128xf32>
    %208 = vector.extract_strided_slice %207 {offsets = [0, 0], sizes = [1, 32], strides = [1, 1]} : vector<1x128xf32> to vector<1x32xf32>
    %209 = arith.negf %208 : vector<1x32xf32>
    %210 = math.exp %209 : vector<1x32xf32>
    %cst_38 = arith.constant 1.000000e+00 : f32
    %211 = vector.broadcast %cst_38 : f32 to vector<1x32xf32>
    %212 = arith.addf %211, %210 : vector<1x32xf32>
    %213 = arith.divf %211, %212 : vector<1x32xf32>
    %214 = vector.extract_strided_slice %207 {offsets = [0, 32], sizes = [1, 32], strides = [1, 1]} : vector<1x128xf32> to vector<1x32xf32>
    %215 = arith.negf %214 : vector<1x32xf32>
    %216 = math.exp %215 : vector<1x32xf32>
    %cst_39 = arith.constant 1.000000e+00 : f32
    %217 = vector.broadcast %cst_39 : f32 to vector<1x32xf32>
    %218 = arith.addf %217, %216 : vector<1x32xf32>
    %219 = arith.divf %217, %218 : vector<1x32xf32>
    %220 = vector.extract_strided_slice %207 {offsets = [0, 64], sizes = [1, 32], strides = [1, 1]} : vector<1x128xf32> to vector<1x32xf32>
    %221 = math.tanh %220 : vector<1x32xf32>
    %222 = vector.extract_strided_slice %207 {offsets = [0, 96], sizes = [1, 32], strides = [1, 1]} : vector<1x128xf32> to vector<1x32xf32>
    %223 = arith.negf %222 : vector<1x32xf32>
    %224 = math.exp %223 : vector<1x32xf32>
    %cst_40 = arith.constant 1.000000e+00 : f32
    %225 = vector.broadcast %cst_40 : f32 to vector<1x32xf32>
    %226 = arith.addf %225, %224 : vector<1x32xf32>
    %227 = arith.divf %225, %226 : vector<1x32xf32>
    %228 = arith.mulf %219, %202 : vector<1x32xf32>
    %229 = arith.mulf %213, %221 : vector<1x32xf32>
    %230 = arith.addf %228, %229 : vector<1x32xf32>
    %231 = math.tanh %230 : vector<1x32xf32>
    %232 = arith.mulf %227, %231 : vector<1x32xf32>
    %c0_41 = arith.constant 0 : index
    %c0_42 = arith.constant 0 : index
    %233 = vector.load %arg4[%c0_41, %c0_42] : memref<32x128xf32, #tpu.memory_space<vmem>>, vector<32x128xf32>
    %cst_43 = arith.constant dense<0.000000e+00> : vector<1x128xf32>
    %234 = tpu.matmul %232, %233, %cst_43 {dimension_numbers = #tpu.dot_dimension_numbers<[1], [0], [0], [1], [0, 0, 1, 1], [], []>} : vector<1x32xf32>, vector<32x128xf32>, vector<1x128xf32> -> vector<1x128xf32>
    %c0_44 = arith.constant 0 : index
    %c0_45 = arith.constant 0 : index
    %235 = vector.load %arg5[%c0_44, %c0_45] : memref<1x128xf32, #tpu.memory_space<vmem>>, vector<1x128xf32>
    %236 = arith.addf %234, %235 : vector<1x128xf32>
    %c0_46 = arith.constant 0 : index
    %c0_47 = arith.constant 0 : index
    %237 = vector.load %arg6[%c0_46, %c0_47] : memref<1x128xf32, #tpu.memory_space<vmem>>, vector<1x128xf32>
    tpu.vector_store %arg6[%c0_46, %c0_47], %236 {strides = array<i32>} : memref<1x128xf32, #tpu.memory_space<vmem>>, vector<1x128xf32>,
    return
  }
}

</mosaic_0001>

<llo_original>
// kernel: tpu_custom_call.1
$region0: #{tpu_custom_call.1}
  #allocation0 [shape = 'u32[]', space=smem, size = 0x4, offset = 0x4, fixed_abs, tag = 'smem constant byte address 0x4 - core index']
  #allocation1 [shape = 'u32[144,128]{1,0:T(1,128)}', space=vmem, size = 0x12000, scoped, tag = 'internal scratch']
  %s0 = inlined_call_operand.hbm [shape: f32[8,16], index: 0, kind: input, shape index: {}]
  %s1 = inlined_call_operand.hbm [shape: f32[16,128], index: 1, kind: input, shape index: {}]
  %s2 = inlined_call_operand.hbm [shape: f32[32,128], index: 2, kind: input, shape index: {}]
  %s3 = inlined_call_operand.vmem [shape: f32[1,128], index: 3, kind: input, shape index: {}]
  %s4 = inlined_call_operand.hbm [shape: f32[32,128], index: 4, kind: input, shape index: {}]
  %s5 = inlined_call_operand.vmem [shape: f32[1,128], index: 5, kind: input, shape index: {}]
  %s6 = inlined_call_operand.hbm [shape: f32[1,128], index: 6, kind: output, shape index: {}]
  %s7 = sld [smem:[#allocation0]]
  $region50: #{tpu_custom_call.1} parent=0
    _
  %s9 = ssub.s32 1, %s7
  %s10 = scalar_select 0, %s9, %s7
  $region1: #{tpu_custom_call.1} parent=0
    #allocation2 [shape = 'u8[4096]{0}', space=vmem, size = 0x1000, scoped, tag = 'input window, operand 0, single buffered']
    #allocation3 [shape = 's32[1]{0}', space=sflag, size = 0x4, scoped, tag = 'scoped memory for tpu_custom_call.1']
    #allocation4 [shape = 's32[1]{0}', space=sflag, size = 0x4, scoped, tag = 'scoped memory for tpu_custom_call.1']
    #allocation5 [shape = 'u8[8192]{0}', space=vmem, size = 0x2000, scoped, tag = 'input window, operand 1, single buffered']
    #allocation6 [shape = 's32[1]{0}', space=sflag, size = 0x4, scoped, tag = 'scoped memory for tpu_custom_call.1']
    #allocation7 [shape = 'u8[16384]{0}', space=vmem, size = 0x4000, scoped, tag = 'input window, operand 2, single buffered']
    #allocation8 [shape = 'u8[16384]{0}', space=vmem, size = 0x4000, scoped, tag = 'input window, operand 4, single buffered']
    #allocation9 [shape = 's32[1]{0}', space=sflag, size = 0x4, scoped, tag = 'scoped memory for tpu_custom_call.1']
    #allocation10 [shape = 'u8[512]{0}', space=vmem, size = 0x400, scoped, tag = 'output window, operand 0, single buffered']
    %11 = vsyncpa [#allocation3], 0
    %12 = vsyncpa [#allocation6], 0
    %13 = vsyncpa [#allocation9], 0
    %14 = vsyncpa [#allocation4], 0
    // Predicated region
    $region2: #{tpu_custom_call.1} parent=1 // pred_check
      _
    $region3: #{tpu_custom_call.1} parent=1 // pred_check_branch
      %16 = sbr.rel (0) target = $region5
    $region4: #{tpu_custom_call.1} parent=1 // pred_region
      %s18 = ssub.s32 128, 128
      %19 = vsyncadd [#allocation3], %s18
      %s21 = sshll.u32 [#allocation2], 4
      %s22 = int_to_ptr.vmem [resolvable:$true] %s21
      %24 = dma.hbm_to_vmem [thread:$0]  %s0, 128, %s22, [#allocation3]
    $region5: #{tpu_custom_call.1} parent=1 // pred_fallthru
      _
    // Predicated region
    $region6: #{tpu_custom_call.1} parent=1 // pred_check
      _
    $region7: #{tpu_custom_call.1} parent=1 // pred_check_branch
      %26 = sbr.rel (0) target = $region9
    $region8: #{tpu_custom_call.1} parent=1 // pred_region
      %s28 = ssub.s32 256, 256
      %29 = vsyncadd [#allocation6], %s28
      %s30 = sshll.u32 [#allocation5], 4
      %s31 = int_to_ptr.vmem [resolvable:$true] %s30
      %36 = dma.hbm_to_vmem [thread:$0]  %s1, 256, %s31, [#allocation6], 128, 128, 8
    $region9: #{tpu_custom_call.1} parent=1 // pred_fallthru
      _
    // Predicated region
    $region10: #{tpu_custom_call.1} parent=1 // pred_check
      _
    $region11: #{tpu_custom_call.1} parent=1 // pred_check_branch
      %38 = sbr.rel (0) target = $region13
    $region12: #{tpu_custom_call.1} parent=1 // pred_region
      %s40 = ssub.s32 512, 512
      %41 = vsyncadd [#allocation6], %s40
      %s42 = sshll.u32 [#allocation7], 4
      %s43 = int_to_ptr.vmem [resolvable:$true] %s42
      %48 = dma.hbm_to_vmem [thread:$0]  %s2, 512, %s43, [#allocation6], 128, 128, 8
    $region13: #{tpu_custom_call.1} parent=1 // pred_fallthru
      _
    // Predicated region
    $region14: #{tpu_custom_call.1} parent=1 // pred_check
      _
    $region15: #{tpu_custom_call.1} parent=1 // pred_check_branch
      %50 = sbr.rel (0) target = $region17
    $region16: #{tpu_custom_call.1} parent=1 // pred_region
      _
    $region17: #{tpu_custom_call.1} parent=1 // pred_fallthru
      _
    // Predicated region
    $region18: #{tpu_custom_call.1} parent=1 // pred_check
      _
    $region19: #{tpu_custom_call.1} parent=1 // pred_check_branch
      %52 = sbr.rel (0) target = $region21
    $region20: #{tpu_custom_call.1} parent=1 // pred_region
      %s54 = ssub.s32 512, 512
      %55 = vsyncadd [#allocation9], %s54
      %s56 = sshll.u32 [#allocation8], 4
      %s57 = int_to_ptr.vmem [resolvable:$true] %s56
      %62 = dma.hbm_to_vmem [thread:$0]  %s4, 512, %s57, [#allocation9], 128, 128, 8
    $region21: #{tpu_custom_call.1} parent=1 // pred_fallthru
      _
    // Predicated region
    $region22: #{tpu_custom_call.1} parent=1 // pred_check
      _
    $region23: #{tpu_custom_call.1} parent=1 // pred_check_branch
      %64 = sbr.rel (0) target = $region25
    $region24: #{tpu_custom_call.1} parent=1 // pred_region
      _
    $region25: #{tpu_custom_call.1} parent=1 // pred_fallthru
      _
    // Predicated region
    $region26: #{tpu_custom_call.1} parent=1 // pred_check
      _
    $region27: #{tpu_custom_call.1} parent=1 // pred_check_branch
      %66 = sbr.rel (0) target = $region29
    $region28: #{tpu_custom_call.1} parent=1 // pred_region
      %67 = dma.done [#allocation3], 128
    $region29: #{tpu_custom_call.1} parent=1 // pred_fallthru
      _
    // Predicated region
    $region30: #{tpu_custom_call.1} parent=1 // pred_check
      _
    $region31: #{tpu_custom_call.1} parent=1 // pred_check_branch
      %69 = sbr.rel (0) target = $region33
    $region32: #{tpu_custom_call.1} parent=1 // pred_region
      %70 = dma.done [#allocation6], 256
    $region33: #{tpu_custom_call.1} parent=1 // pred_fallthru
      _
    // Predicated region
    $region34: #{tpu_custom_call.1} parent=1 // pred_check
      _
    $region35: #{tpu_custom_call.1} parent=1 // pred_check_branch
      %72 = sbr.rel (0) target = $region37
    $region36: #{tpu_custom_call.1} parent=1 // pred_region
      %73 = dma.done [#allocation6], 512
    $region37: #{tpu_custom_call.1} parent=1 // pred_fallthru
      _
    // Predicated region
    $region38: #{tpu_custom_call.1} parent=1 // pred_check
      _
    $region39: #{tpu_custom_call.1} parent=1 // pred_check_branch
      %75 = sbr.rel (0) target = $region41
    $region40: #{tpu_custom_call.1} parent=1 // pred_region
      %76 = dma.done [#allocation9], 512
    $region41: #{tpu_custom_call.1} parent=1 // pred_fallthru
      _
    %v77 = vld [vmem:[#allocation2] sm:$0xff]
    %v78 = vld [vmem:[#allocation5] sm:$0xff]
    %v79 = vld [vmem:[#allocation5 + $0x8] sm:$0xff]
    %v80 = vld [vmem:[%s3] sm:$0x1]
    %v82 = vlaneseq
    %v83 = vshrl.u32 %v82, 7
    %v84 = vsub.s32 0, %v83
    %v85 = vrot.slane %v80, %v84
    %vm87 = vcmask 130048
    %v89 = vsel %vm87, %v77, 0
    %91 = vmatprep.subr.mxu0 0.0
    %92 = vmatpush1.msra.mxu0 0.0
    %93 = vmatprep.subr.mxu0 0.0
    %94 = vmatpush1.msra.mxu0 0.0
    %95 = vmatprep.subr.mxu0 0.0
    %96 = vmatpush1.msra.mxu0 0.0
    %97 = vmatprep.subr.mxu0 0.0
    %98 = vmatpush1.msra.mxu0 0.0
    %99 = vmatprep.subr.mxu0 0.0
    %100 = vmatpush1.msra.mxu0 0.0
    %101 = vmatprep.subr.mxu0 0.0
    %102 = vmatpush1.msra.mxu0 0.0
    %103 = vmatprep.subr.mxu0 0.0
    %104 = vmatpush1.msra.mxu0 0.0
    %105 = vmatprep.subr.mxu0 0.0
    %106 = vmatpush1.msra.mxu0 0.0
    %107 = vmatprep.subr.mxu0 0.0
    %108 = vmatpush1.msra.mxu0 0.0
    %109 = vmatprep.subr.mxu0 0.0
    %110 = vmatpush1.msra.mxu0 0.0
    %111 = vmatprep.subr.mxu0 0.0
    %112 = vmatpush1.msra.mxu0 0.0
    %113 = vmatprep.subr.mxu0 0.0
    %114 = vmatpush1.msra.mxu0 0.0
    %115 = vmatprep.subr.mxu0 0.0
    %116 = vmatpush1.msra.mxu0 0.0
    %117 = vmatprep.subr.mxu0 0.0
    %118 = vmatpush1.msra.mxu0 0.0
    %119 = vmatprep.subr.mxu0 0.0
    %120 = vmatpush1.msra.mxu0 %v79
    %121 = vmatprep.subr.mxu0 0.0
    %122 = vmatpush1.msra.mxu0 %v78
    %123 = vmatprep.subr.mxu0 0.0
    %124 = vmatpush2.msra.mxu0 0.0
    %125 = vmatprep.subr.mxu0 0.0
    %126 = vmatpush2.msra.mxu0 0.0
    %127 = vmatprep.subr.mxu0 0.0
    %128 = vmatpush2.msra.mxu0 0.0
    %129 = vmatprep.subr.mxu0 0.0
    %130 = vmatpush2.msra.mxu0 0.0
    %131 = vmatprep.subr.mxu0 0.0
    %132 = vmatpush2.msra.mxu0 0.0
    %133 = vmatprep.subr.mxu0 0.0
    %134 = vmatpush2.msra.mxu0 0.0
    %135 = vmatprep.subr.mxu0 0.0
    %136 = vmatpush2.msra.mxu0 0.0
    %137 = vmatprep.subr.mxu0 0.0
    %138 = vmatpush2.msra.mxu0 0.0
    %139 = vmatprep.subr.mxu0 0.0
    %140 = vmatpush2.msra.mxu0 0.0
    %141 = vmatprep.subr.mxu0 0.0
    %142 = vmatpush2.msra.mxu0 0.0
    %143 = vmatprep.subr.mxu0 0.0
    %144 = vmatpush2.msra.mxu0 0.0
    %145 = vmatprep.subr.mxu0 0.0
    %146 = vmatpush2.msra.mxu0 0.0
    %147 = vmatprep.subr.mxu0 0.0
    %148 = vmatpush2.msra.mxu0 0.0
    %149 = vmatprep.subr.mxu0 0.0
    %150 = vmatpush2.msra.mxu0 0.0
    %151 = vmatprep.subr.mxu0 0.0
    %152 = vmatpush2.msra.mxu0 0.0
    %153 = vmatprep.subr.mxu0 0.0
    %154 = vmatpush2.msra.mxu0 0.0
    %155 = vmatprep.mubr.f32.mxu0 0.0
    %156 = vmatmul.mubr.f32.gmra.mxu0 %v89
    %v157 = vpop.f32.mrf.mxu0
    %v158 = vadd.f32 %v85, %v157
    %v159 = vpop.f32.mrf.mxu0
    %160 = vdwg.mxu0
    %v161 = vld [vmem:[#allocation7] sm:$0xff]
    %v162 = vld [vmem:[#allocation7 + $0x8] sm:$0xff]
    %v163 = vld [vmem:[#allocation7 + $0x10] sm:$0xff]
    %v164 = vld [vmem:[#allocation7 + $0x18] sm:$0xff]
    %vm165 = vcmask 261120
    %v167 = vsel %vm165, 0.0, 0
    %169 = vmatprep.subr.mxu0 0.0
    %170 = vmatpush1.msra.mxu0 0.0
    %171 = vmatprep.subr.mxu0 0.0
    %172 = vmatpush1.msra.mxu0 0.0
    %173 = vmatprep.subr.mxu0 0.0
    %174 = vmatpush1.msra.mxu0 0.0
    %175 = vmatprep.subr.mxu0 0.0
    %176 = vmatpush1.msra.mxu0 0.0
    %177 = vmatprep.subr.mxu0 0.0
    %178 = vmatpush1.msra.mxu0 0.0
    %179 = vmatprep.subr.mxu0 0.0
    %180 = vmatpush1.msra.mxu0 0.0
    %181 = vmatprep.subr.mxu0 0.0
    %182 = vmatpush1.msra.mxu0 0.0
    %183 = vmatprep.subr.mxu0 0.0
    %184 = vmatpush1.msra.mxu0 0.0
    %185 = vmatprep.subr.mxu0 0.0
    %186 = vmatpush1.msra.mxu0 0.0
    %187 = vmatprep.subr.mxu0 0.0
    %188 = vmatpush1.msra.mxu0 0.0
    %189 = vmatprep.subr.mxu0 0.0
    %190 = vmatpush1.msra.mxu0 0.0
    %191 = vmatprep.subr.mxu0 0.0
    %192 = vmatpush1.msra.mxu0 0.0
    %193 = vmatprep.subr.mxu0 0.0
    %194 = vmatpush1.msra.mxu0 %v164
    %195 = vmatprep.subr.mxu0 0.0
    %196 = vmatpush1.msra.mxu0 %v163
    %197 = vmatprep.subr.mxu0 0.0
    %198 = vmatpush1.msra.mxu0 %v162
    %199 = vmatprep.subr.mxu0 0.0
    %200 = vmatpush1.msra.mxu0 %v161
    %201 = vmatprep.subr.mxu0 0.0
    %202 = vmatpush2.msra.mxu0 0.0
    %203 = vmatprep.subr.mxu0 0.0
    %204 = vmatpush2.msra.mxu0 0.0
    %205 = vmatprep.subr.mxu0 0.0
    %206 = vmatpush2.msra.mxu0 0.0
    %207 = vmatprep.subr.mxu0 0.0
    %208 = vmatpush2.msra.mxu0 0.0
    %209 = vmatprep.subr.mxu0 0.0
    %210 = vmatpush2.msra.mxu0 0.0
    %211 = vmatprep.subr.mxu0 0.0
    %212 = vmatpush2.msra.mxu0 0.0
    %213 = vmatprep.subr.mxu0 0.0
    %214 = vmatpush2.msra.mxu0 0.0
    %215 = vmatprep.subr.mxu0 0.0
    %216 = vmatpush2.msra.mxu0 0.0
    %217 = vmatprep.subr.mxu0 0.0
    %218 = vmatpush2.msra.mxu0 0.0
    %219 = vmatprep.subr.mxu0 0.0
    %220 = vmatpush2.msra.mxu0 0.0
    %221 = vmatprep.subr.mxu0 0.0
    %222 = vmatpush2.msra.mxu0 0.0
    %223 = vmatprep.subr.mxu0 0.0
    %224 = vmatpush2.msra.mxu0 0.0
    %225 = vmatprep.subr.mxu0 0.0
    %226 = vmatpush2.msra.mxu0 0.0
    %227 = vmatprep.subr.mxu0 0.0
    %228 = vmatpush2.msra.mxu0 0.0
    %229 = vmatprep.subr.mxu0 0.0
    %230 = vmatpush2.msra.mxu0 0.0
    %231 = vmatprep.subr.mxu0 0.0
    %232 = vmatpush2.msra.mxu0 0.0
    %233 = vmatprep.mubr.f32.mxu0 0.0
    %234 = vmatmul.mubr.f32.gmra.mxu0 %v167
    %v235 = vpop.f32.mrf.mxu0
    %v236 = vadd.f32 %v158, %v235
    %v237 = vpop.f32.mrf.mxu0
    %238 = vdwg.mxu0
    %v239 = vxor.u32 %v236, 2147483648
    %v240 = vmul.f32 %v239, 1.442695
    %v241 = vpow.pop %v240
    %v242 = vadd.f32 %v241, 1.0
    %v243 = vrcp.pop %v242
    %v244 = vmul.f32 1.0, %v243
    %v245 = vtanh.pop %v236
    %v246 = vmul.f32 %v244, 0.0
    %248 = vrot.lane.b32.xlu0 %v245, 64
    %v249 = vpop.permute.xlu0 %248
    %v251 = vmul.f32 %v244, %v249
    %253 = vrot.lane.b32.xlu0 %v251, 32
    %v254 = vpop.permute.xlu0 %253
    %v256 = vadd.f32 %v246, %v254
    %v257 = vtanh.pop %v256
    %259 = vrot.lane.b32.xlu0 %v257, 64
    %v260 = vpop.permute.xlu0 %259
    %v262 = vmul.f32 %v244, %v260
    %264 = vrot.lane.b32.xlu0 %v262, 32
    %v265 = vpop.permute.xlu0 %264
    %v267 = vrot.slane %v158, 1
    %v269 = vsel %vm165, %v265, 0
    %271 = vmatprep.subr.mxu0 0.0
    %272 = vmatpush1.msra.mxu0 0.0
    %273 = vmatprep.subr.mxu0 0.0
    %274 = vmatpush1.msra.mxu0 0.0
    %275 = vmatprep.subr.mxu0 0.0
    %276 = vmatpush1.msra.mxu0 0.0
    %277 = vmatprep.subr.mxu0 0.0
    %278 = vmatpush1.msra.mxu0 0.0
    %279 = vmatprep.subr.mxu0 0.0
    %280 = vmatpush1.msra.mxu0 0.0
    %281 = vmatprep.subr.mxu0 0.0
    %282 = vmatpush1.msra.mxu0 0.0
    %283 = vmatprep.subr.mxu0 0.0
    %284 = vmatpush1.msra.mxu0 0.0
    %285 = vmatprep.subr.mxu0 0.0
    %286 = vmatpush1.msra.mxu0 0.0
    %287 = vmatprep.subr.mxu0 0.0
    %288 = vmatpush1.msra.mxu0 0.0
    %289 = vmatprep.subr.mxu0 0.0
    %290 = vmatpush1.msra.mxu0 0.0
    %291 = vmatprep.subr.mxu0 0.0
    %292 = vmatpush1.msra.mxu0 0.0
    %293 = vmatprep.subr.mxu0 0.0
    %294 = vmatpush1.msra.mxu0 0.0
    %295 = vmatprep.subr.mxu0 0.0
    %296 = vmatpush1.msra.mxu0 %v164
    %297 = vmatprep.subr.mxu0 0.0
    %298 = vmatpush1.msra.mxu0 %v163
    %299 = vmatprep.subr.mxu0 0.0
    %300 = vmatpush1.msra.mxu0 %v162
    %301 = vmatprep.subr.mxu0 0.0
    %302 = vmatpush1.msra.mxu0 %v161
    %303 = vmatprep.subr.mxu0 0.0
    %304 = vmatpush2.msra.mxu0 0.0
    %305 = vmatprep.subr.mxu0 0.0
    %306 = vmatpush2.msra.mxu0 0.0
    %307 = vmatprep.subr.mxu0 0.0
    %308 = vmatpush2.msra.mxu0 0.0
    %309 = vmatprep.subr.mxu0 0.0
    %310 = vmatpush2.msra.mxu0 0.0
    %311 = vmatprep.subr.mxu0 0.0
    %312 = vmatpush2.msra.mxu0 0.0
    %313 = vmatprep.subr.mxu0 0.0
    %314 = vmatpush2.msra.mxu0 0.0
    %315 = vmatprep.subr.mxu0 0.0
    %316 = vmatpush2.msra.mxu0 0.0
    %317 = vmatprep.subr.mxu0 0.0
    %318 = vmatpush2.msra.mxu0 0.0
    %319 = vmatprep.subr.mxu0 0.0
    %320 = vmatpush2.msra.mxu0 0.0
    %321 = vmatprep.subr.mxu0 0.0
    %322 = vmatpush2.msra.mxu0 0.0
    %323 = vmatprep.subr.mxu0 0.0
    %324 = vmatpush2.msra.mxu0 0.0
    %325 = vmatprep.subr.mxu0 0.0
    %326 = vmatpush2.msra.mxu0 0.0
    %327 = vmatprep.subr.mxu0 0.0
    %328 = vmatpush2.msra.mxu0 0.0
    %329 = vmatprep.subr.mxu0 0.0
    %330 = vmatpush2.msra.mxu0 0.0
    %331 = vmatprep.subr.mxu0 0.0
    %332 = vmatpush2.msra.mxu0 0.0
    %333 = vmatprep.subr.mxu0 0.0
    %334 = vmatpush2.msra.mxu0 0.0
    %335 = vmatprep.mubr.f32.mxu0 0.0
    %336 = vmatmul.mubr.f32.gmra.mxu0 %v269
    %v337 = vpop.f32.mrf.mxu0
    %v338 = vadd.f32 %v267, %v337
    %v339 = vpop.f32.mrf.mxu0
    %340 = vdwg.mxu0
    %v341 = vxor.u32 %v338, 2147483648
    %v342 = vmul.f32 %v341, 1.442695
    %v343 = vpow.pop %v342
    %v344 = vadd.f32 %v343, 1.0
    %v345 = vrcp.pop %v344
    %v346 = vmul.f32 1.0, %v345
    %v347 = vtanh.pop %v338
    %v348 = vmul.f32 %v346, %v256
    %350 = vrot.lane.b32.xlu0 %v347, 64
    %v351 = vpop.permute.xlu0 %350
    %v353 = vmul.f32 %v346, %v351
    %355 = vrot.lane.b32.xlu0 %v353, 32
    %v356 = vpop.permute.xlu0 %355
    %v358 = vadd.f32 %v348, %v356
    %v359 = vtanh.pop %v358
    %361 = vrot.lane.b32.xlu0 %v359, 64
    %v362 = vpop.permute.xlu0 %361
    %v364 = vmul.f32 %v346, %v362
    %366 = vrot.lane.b32.xlu0 %v364, 32
    %v367 = vpop.permute.xlu0 %366
    %v368 = vrot.slane %v158, 2
    %v370 = vsel %vm165, %v367, 0
    %372 = vmatprep.subr.mxu0 0.0
    %373 = vmatpush1.msra.mxu0 0.0
    %374 = vmatprep.subr.mxu0 0.0
    %375 = vmatpush1.msra.mxu0 0.0
    %376 = vmatprep.subr.mxu0 0.0
    %377 = vmatpush1.msra.mxu0 0.0
    %378 = vmatprep.subr.mxu0 0.0
    %379 = vmatpush1.msra.mxu0 0.0
    %380 = vmatprep.subr.mxu0 0.0
    %381 = vmatpush1.msra.mxu0 0.0
    %382 = vmatprep.subr.mxu0 0.0
    %383 = vmatpush1.msra.mxu0 0.0
    %384 = vmatprep.subr.mxu0 0.0
    %385 = vmatpush1.msra.mxu0 0.0
    %386 = vmatprep.subr.mxu0 0.0
    %387 = vmatpush1.msra.mxu0 0.0
    %388 = vmatprep.subr.mxu0 0.0
    %389 = vmatpush1.msra.mxu0 0.0
    %390 = vmatprep.subr.mxu0 0.0
    %391 = vmatpush1.msra.mxu0 0.0
    %392 = vmatprep.subr.mxu0 0.0
    %393 = vmatpush1.msra.mxu0 0.0
    %394 = vmatprep.subr.mxu0 0.0
    %395 = vmatpush1.msra.mxu0 0.0
    %396 = vmatprep.subr.mxu0 0.0
    %397 = vmatpush1.msra.mxu0 %v164
    %398 = vmatprep.subr.mxu0 0.0
    %399 = vmatpush1.msra.mxu0 %v163
    %400 = vmatprep.subr.mxu0 0.0
    %401 = vmatpush1.msra.mxu0 %v162
    %402 = vmatprep.subr.mxu0 0.0
    %403 = vmatpush1.msra.mxu0 %v161
    %404 = vmatprep.subr.mxu0 0.0
    %405 = vmatpush2.msra.mxu0 0.0
    %406 = vmatprep.subr.mxu0 0.0
    %407 = vmatpush2.msra.mxu0 0.0
    %408 = vmatprep.subr.mxu0 0.0
    %409 = vmatpush2.msra.mxu0 0.0
    %410 = vmatprep.subr.mxu0 0.0
    %411 = vmatpush2.msra.mxu0 0.0
    %412 = vmatprep.subr.mxu0 0.0
    %413 = vmatpush2.msra.mxu0 0.0
    %414 = vmatprep.subr.mxu0 0.0
    %415 = vmatpush2.msra.mxu0 0.0
    %416 = vmatprep.subr.mxu0 0.0
    %417 = vmatpush2.msra.mxu0 0.0
    %418 = vmatprep.subr.mxu0 0.0
    %419 = vmatpush2.msra.mxu0 0.0
    %420 = vmatprep.subr.mxu0 0.0
    %421 = vmatpush2.msra.mxu0 0.0
    %422 = vmatprep.subr.mxu0 0.0
    %423 = vmatpush2.msra.mxu0 0.0
    %424 = vmatprep.subr.mxu0 0.0
    %425 = vmatpush2.msra.mxu0 0.0
    %426 = vmatprep.subr.mxu0 0.0
    %427 = vmatpush2.msra.mxu0 0.0
    %428 = vmatprep.subr.mxu0 0.0
    %429 = vmatpush2.msra.mxu0 0.0
    %430 = vmatprep.subr.mxu0 0.0
    %431 = vmatpush2.msra.mxu0 0.0
    %432 = vmatprep.subr.mxu0 0.0
    %433 = vmatpush2.msra.mxu0 0.0
    %434 = vmatprep.subr.mxu0 0.0
    %435 = vmatpush2.msra.mxu0 0.0
    %436 = vmatprep.mubr.f32.mxu0 0.0
    %437 = vmatmul.mubr.f32.gmra.mxu0 %v370
    %v438 = vpop.f32.mrf.mxu0
    %v439 = vadd.f32 %v368, %v438
    %v440 = vpop.f32.mrf.mxu0
    %441 = vdwg.mxu0
    %v442 = vxor.u32 %v439, 2147483648
    %v443 = vmul.f32 %v442, 1.442695
    %v444 = vpow.pop %v443
    %v445 = vadd.f32 %v444, 1.0
    %v446 = vrcp.pop %v445
    %v447 = vmul.f32 1.0, %v446
    %v448 = vtanh.pop %v439
    %v449 = vmul.f32 %v447, %v358
    %451 = vrot.lane.b32.xlu0 %v448, 64
    %v452 = vpop.permute.xlu0 %451
    %v454 = vmul.f32 %v447, %v452
    %456 = vrot.lane.b32.xlu0 %v454, 32
    %v457 = vpop.permute.xlu0 %456
    %v459 = vadd.f32 %v449, %v457
    %v460 = vtanh.pop %v459
    %462 = vrot.lane.b32.xlu0 %v460, 64
    %v463 = vpop.permute.xlu0 %462
    %v465 = vmul.f32 %v447, %v463
    %467 = vrot.lane.b32.xlu0 %v465, 32
    %v468 = vpop.permute.xlu0 %467
    %v469 = vrot.slane %v158, 3
    %v471 = vsel %vm165, %v468, 0
    %473 = vmatprep.subr.mxu0 0.0
    %474 = vmatpush1.msra.mxu0 0.0
    %475 = vmatprep.subr.mxu0 0.0
    %476 = vmatpush1.msra.mxu0 0.0
    %477 = vmatprep.subr.mxu0 0.0
    %478 = vmatpush1.msra.mxu0 0.0
    %479 = vmatprep.subr.mxu0 0.0
    %480 = vmatpush1.msra.mxu0 0.0
    %481 = vmatprep.subr.mxu0 0.0
    %482 = vmatpush1.msra.mxu0 0.0
    %483 = vmatprep.subr.mxu0 0.0
    %484 = vmatpush1.msra.mxu0 0.0
    %485 = vmatprep.subr.mxu0 0.0
    %486 = vmatpush1.msra.mxu0 0.0
    %487 = vmatprep.subr.mxu0 0.0
    %488 = vmatpush1.msra.mxu0 0.0
    %489 = vmatprep.subr.mxu0 0.0
    %490 = vmatpush1.msra.mxu0 0.0
    %491 = vmatprep.subr.mxu0 0.0
    %492 = vmatpush1.msra.mxu0 0.0
    %493 = vmatprep.subr.mxu0 0.0
    %494 = vmatpush1.msra.mxu0 0.0
    %495 = vmatprep.subr.mxu0 0.0
    %496 = vmatpush1.msra.mxu0 0.0
    %497 = vmatprep.subr.mxu0 0.0
    %498 = vmatpush1.msra.mxu0 %v164
    %499 = vmatprep.subr.mxu0 0.0
    %500 = vmatpush1.msra.mxu0 %v163
    %501 = vmatprep.subr.mxu0 0.0
    %502 = vmatpush1.msra.mxu0 %v162
    %503 = vmatprep.subr.mxu0 0.0
    %504 = vmatpush1.msra.mxu0 %v161
    %505 = vmatprep.subr.mxu0 0.0
    %506 = vmatpush2.msra.mxu0 0.0
    %507 = vmatprep.subr.mxu0 0.0
    %508 = vmatpush2.msra.mxu0 0.0
    %509 = vmatprep.subr.mxu0 0.0
    %510 = vmatpush2.msra.mxu0 0.0
    %511 = vmatprep.subr.mxu0 0.0
    %512 = vmatpush2.msra.mxu0 0.0
    %513 = vmatprep.subr.mxu0 0.0
    %514 = vmatpush2.msra.mxu0 0.0
    %515 = vmatprep.subr.mxu0 0.0
    %516 = vmatpush2.msra.mxu0 0.0
    %517 = vmatprep.subr.mxu0 0.0
    %518 = vmatpush2.msra.mxu0 0.0
    %519 = vmatprep.subr.mxu0 0.0
    %520 = vmatpush2.msra.mxu0 0.0
    %521 = vmatprep.subr.mxu0 0.0
    %522 = vmatpush2.msra.mxu0 0.0
    %523 = vmatprep.subr.mxu0 0.0
    %524 = vmatpush2.msra.mxu0 0.0
    %525 = vmatprep.subr.mxu0 0.0
    %526 = vmatpush2.msra.mxu0 0.0
    %527 = vmatprep.subr.mxu0 0.0
    %528 = vmatpush2.msra.mxu0 0.0
    %529 = vmatprep.subr.mxu0 0.0
    %530 = vmatpush2.msra.mxu0 0.0
    %531 = vmatprep.subr.mxu0 0.0
    %532 = vmatpush2.msra.mxu0 0.0
    %533 = vmatprep.subr.mxu0 0.0
    %534 = vmatpush2.msra.mxu0 0.0
    %535 = vmatprep.subr.mxu0 0.0
    %536 = vmatpush2.msra.mxu0 0.0
    %537 = vmatprep.mubr.f32.mxu0 0.0
    %538 = vmatmul.mubr.f32.gmra.mxu0 %v471
    %v539 = vpop.f32.mrf.mxu0
    %v540 = vadd.f32 %v469, %v539
    %v541 = vpop.f32.mrf.mxu0
    %542 = vdwg.mxu0
    %v543 = vxor.u32 %v540, 2147483648
    %v544 = vmul.f32 %v543, 1.442695
    %v545 = vpow.pop %v544
    %v546 = vadd.f32 %v545, 1.0
    %v547 = vrcp.pop %v546
    %v548 = vmul.f32 1.0, %v547
    %v549 = vtanh.pop %v540
    %v550 = vmul.f32 %v548, %v459
    %552 = vrot.lane.b32.xlu0 %v549, 64
    %v553 = vpop.permute.xlu0 %552
    %v555 = vmul.f32 %v548, %v553
    %557 = vrot.lane.b32.xlu0 %v555, 32
    %v558 = vpop.permute.xlu0 %557
    %v560 = vadd.f32 %v550, %v558
    %v561 = vtanh.pop %v560
    %563 = vrot.lane.b32.xlu0 %v561, 64
    %v564 = vpop.permute.xlu0 %563
    %v566 = vmul.f32 %v548, %v564
    %568 = vrot.lane.b32.xlu0 %v566, 32
    %v569 = vpop.permute.xlu0 %568
    %v570 = vrot.slane %v158, 4
    %v572 = vsel %vm165, %v569, 0
    %574 = vmatprep.subr.mxu0 0.0
    %575 = vmatpush1.msra.mxu0 0.0
    %576 = vmatprep.subr.mxu0 0.0
    %577 = vmatpush1.msra.mxu0 0.0
    %578 = vmatprep.subr.mxu0 0.0
    %579 = vmatpush1.msra.mxu0 0.0
    %580 = vmatprep.subr.mxu0 0.0
    %581 = vmatpush1.msra.mxu0 0.0
    %582 = vmatprep.subr.mxu0 0.0
    %583 = vmatpush1.msra.mxu0 0.0
    %584 = vmatprep.subr.mxu0 0.0
    %585 = vmatpush1.msra.mxu0 0.0
    %586 = vmatprep.subr.mxu0 0.0
    %587 = vmatpush1.msra.mxu0 0.0
    %588 = vmatprep.subr.mxu0 0.0
    %589 = vmatpush1.msra.mxu0 0.0
    %590 = vmatprep.subr.mxu0 0.0
    %591 = vmatpush1.msra.mxu0 0.0
    %592 = vmatprep.subr.mxu0 0.0
    %593 = vmatpush1.msra.mxu0 0.0
    %594 = vmatprep.subr.mxu0 0.0
    %595 = vmatpush1.msra.mxu0 0.0
    %596 = vmatprep.subr.mxu0 0.0
    %597 = vmatpush1.msra.mxu0 0.0
    %598 = vmatprep.subr.mxu0 0.0
    %599 = vmatpush1.msra.mxu0 %v164
    %600 = vmatprep.subr.mxu0 0.0
    %601 = vmatpush1.msra.mxu0 %v163
    %602 = vmatprep.subr.mxu0 0.0
    %603 = vmatpush1.msra.mxu0 %v162
    %604 = vmatprep.subr.mxu0 0.0
    %605 = vmatpush1.msra.mxu0 %v161
    %606 = vmatprep.subr.mxu0 0.0
    %607 = vmatpush2.msra.mxu0 0.0
    %608 = vmatprep.subr.mxu0 0.0
    %609 = vmatpush2.msra.mxu0 0.0
    %610 = vmatprep.subr.mxu0 0.0
    %611 = vmatpush2.msra.mxu0 0.0
    %612 = vmatprep.subr.mxu0 0.0
    %613 = vmatpush2.msra.mxu0 0.0
    %614 = vmatprep.subr.mxu0 0.0
    %615 = vmatpush2.msra.mxu0 0.0
    %616 = vmatprep.subr.mxu0 0.0
    %617 = vmatpush2.msra.mxu0 0.0
    %618 = vmatprep.subr.mxu0 0.0
    %619 = vmatpush2.msra.mxu0 0.0
    %620 = vmatprep.subr.mxu0 0.0
    %621 = vmatpush2.msra.mxu0 0.0
    %622 = vmatprep.subr.mxu0 0.0
    %623 = vmatpush2.msra.mxu0 0.0
    %624 = vmatprep.subr.mxu0 0.0
    %625 = vmatpush2.msra.mxu0 0.0
    %626 = vmatprep.subr.mxu0 0.0
    %627 = vmatpush2.msra.mxu0 0.0
    %628 = vmatprep.subr.mxu0 0.0
    %629 = vmatpush2.msra.mxu0 0.0
    %630 = vmatprep.subr.mxu0 0.0
    %631 = vmatpush2.msra.mxu0 0.0
    %632 = vmatprep.subr.mxu0 0.0
    %633 = vmatpush2.msra.mxu0 0.0
    %634 = vmatprep.subr.mxu0 0.0
    %635 = vmatpush2.msra.mxu0 0.0
    %636 = vmatprep.subr.mxu0 0.0
    %637 = vmatpush2.msra.mxu0 0.0
    %638 = vmatprep.mubr.f32.mxu0 0.0
    %639 = vmatmul.mubr.f32.gmra.mxu0 %v572
    %v640 = vpop.f32.mrf.mxu0
    %v641 = vadd.f32 %v570, %v640
    %v642 = vpop.f32.mrf.mxu0
    %643 = vdwg.mxu0
    %v644 = vxor.u32 %v641, 2147483648
    %v645 = vmul.f32 %v644, 1.442695
    %v646 = vpow.pop %v645
    %v647 = vadd.f32 %v646, 1.0
    %v648 = vrcp.pop %v647
    %v649 = vmul.f32 1.0, %v648
    %v650 = vtanh.pop %v641
    %v651 = vmul.f32 %v649, %v560
    %653 = vrot.lane.b32.xlu0 %v650, 64
    %v654 = vpop.permute.xlu0 %653
    %v656 = vmul.f32 %v649, %v654
    %658 = vrot.lane.b32.xlu0 %v656, 32
    %v659 = vpop.permute.xlu0 %658
    %v661 = vadd.f32 %v651, %v659
    %v662 = vtanh.pop %v661
    %664 = vrot.lane.b32.xlu0 %v662, 64
    %v665 = vpop.permute.xlu0 %664
    %v667 = vmul.f32 %v649, %v665
    %669 = vrot.lane.b32.xlu0 %v667, 32
    %v670 = vpop.permute.xlu0 %669
    %v671 = vrot.slane %v158, 5
    %v673 = vsel %vm165, %v670, 0
    %675 = vmatprep.subr.mxu0 0.0
    %676 = vmatpush1.msra.mxu0 0.0
    %677 = vmatprep.subr.mxu0 0.0
    %678 = vmatpush1.msra.mxu0 0.0
    %679 = vmatprep.subr.mxu0 0.0
    %680 = vmatpush1.msra.mxu0 0.0
    %681 = vmatprep.subr.mxu0 0.0
    %682 = vmatpush1.msra.mxu0 0.0
    %683 = vmatprep.subr.mxu0 0.0
    %684 = vmatpush1.msra.mxu0 0.0
    %685 = vmatprep.subr.mxu0 0.0
    %686 = vmatpush1.msra.mxu0 0.0
    %687 = vmatprep.subr.mxu0 0.0
    %688 = vmatpush1.msra.mxu0 0.0
    %689 = vmatprep.subr.mxu0 0.0
    %690 = vmatpush1.msra.mxu0 0.0
    %691 = vmatprep.subr.mxu0 0.0
    %692 = vmatpush1.msra.mxu0 0.0
    %693 = vmatprep.subr.mxu0 0.0
    %694 = vmatpush1.msra.mxu0 0.0
    %695 = vmatprep.subr.mxu0 0.0
    %696 = vmatpush1.msra.mxu0 0.0
    %697 = vmatprep.subr.mxu0 0.0
    %698 = vmatpush1.msra.mxu0 0.0
    %699 = vmatprep.subr.mxu0 0.0
    %700 = vmatpush1.msra.mxu0 %v164
    %701 = vmatprep.subr.mxu0 0.0
    %702 = vmatpush1.msra.mxu0 %v163
    %703 = vmatprep.subr.mxu0 0.0
    %704 = vmatpush1.msra.mxu0 %v162
    %705 = vmatprep.subr.mxu0 0.0
    %706 = vmatpush1.msra.mxu0 %v161
    %707 = vmatprep.subr.mxu0 0.0
    %708 = vmatpush2.msra.mxu0 0.0
    %709 = vmatprep.subr.mxu0 0.0
    %710 = vmatpush2.msra.mxu0 0.0
    %711 = vmatprep.subr.mxu0 0.0
    %712 = vmatpush2.msra.mxu0 0.0
    %713 = vmatprep.subr.mxu0 0.0
    %714 = vmatpush2.msra.mxu0 0.0
    %715 = vmatprep.subr.mxu0 0.0
    %716 = vmatpush2.msra.mxu0 0.0
    %717 = vmatprep.subr.mxu0 0.0
    %718 = vmatpush2.msra.mxu0 0.0
    %719 = vmatprep.subr.mxu0 0.0
    %720 = vmatpush2.msra.mxu0 0.0
    %721 = vmatprep.subr.mxu0 0.0
    %722 = vmatpush2.msra.mxu0 0.0
    %723 = vmatprep.subr.mxu0 0.0
    %724 = vmatpush2.msra.mxu0 0.0
    %725 = vmatprep.subr.mxu0 0.0
    %726 = vmatpush2.msra.mxu0 0.0
    %727 = vmatprep.subr.mxu0 0.0
    %728 = vmatpush2.msra.mxu0 0.0
    %729 = vmatprep.subr.mxu0 0.0
    %730 = vmatpush2.msra.mxu0 0.0
    %731 = vmatprep.subr.mxu0 0.0
    %732 = vmatpush2.msra.mxu0 0.0
    %733 = vmatprep.subr.mxu0 0.0
    %734 = vmatpush2.msra.mxu0 0.0
    %735 = vmatprep.subr.mxu0 0.0
    %736 = vmatpush2.msra.mxu0 0.0
    %737 = vmatprep.subr.mxu0 0.0
    %738 = vmatpush2.msra.mxu0 0.0
    %739 = vmatprep.mubr.f32.mxu0 0.0
    %740 = vmatmul.mubr.f32.gmra.mxu0 %v673
    %v741 = vpop.f32.mrf.mxu0
    %v742 = vadd.f32 %v671, %v741
    %v743 = vpop.f32.mrf.mxu0
    %744 = vdwg.mxu0
    %v745 = vxor.u32 %v742, 2147483648
    %v746 = vmul.f32 %v745, 1.442695
    %v747 = vpow.pop %v746
    %v748 = vadd.f32 %v747, 1.0
    %v749 = vrcp.pop %v748
    %v750 = vmul.f32 1.0, %v749
    %v751 = vtanh.pop %v742
    %v752 = vmul.f32 %v750, %v661
    %754 = vrot.lane.b32.xlu0 %v751, 64
    %v755 = vpop.permute.xlu0 %754
    %v757 = vmul.f32 %v750, %v755
    %759 = vrot.lane.b32.xlu0 %v757, 32
    %v760 = vpop.permute.xlu0 %759
    %v762 = vadd.f32 %v752, %v760
    %v763 = vtanh.pop %v762
    %765 = vrot.lane.b32.xlu0 %v763, 64
    %v766 = vpop.permute.xlu0 %765
    %v768 = vmul.f32 %v750, %v766
    %770 = vrot.lane.b32.xlu0 %v768, 32
    %v771 = vpop.permute.xlu0 %770
    %v772 = vrot.slane %v158, 6
    %v774 = vsel %vm165, %v771, 0
    %776 = vmatprep.subr.mxu0 0.0
    %777 = vmatpush1.msra.mxu0 0.0
    %778 = vmatprep.subr.mxu0 0.0
    %779 = vmatpush1.msra.mxu0 0.0
    %780 = vmatprep.subr.mxu0 0.0
    %781 = vmatpush1.msra.mxu0 0.0
    %782 = vmatprep.subr.mxu0 0.0
    %783 = vmatpush1.msra.mxu0 0.0
    %784 = vmatprep.subr.mxu0 0.0
    %785 = vmatpush1.msra.mxu0 0.0
    %786 = vmatprep.subr.mxu0 0.0
    %787 = vmatpush1.msra.mxu0 0.0
    %788 = vmatprep.subr.mxu0 0.0
    %789 = vmatpush1.msra.mxu0 0.0
    %790 = vmatprep.subr.mxu0 0.0
    %791 = vmatpush1.msra.mxu0 0.0
    %792 = vmatprep.subr.mxu0 0.0
    %793 = vmatpush1.msra.mxu0 0.0
    %794 = vmatprep.subr.mxu0 0.0
    %795 = vmatpush1.msra.mxu0 0.0
    %796 = vmatprep.subr.mxu0 0.0
    %797 = vmatpush1.msra.mxu0 0.0
    %798 = vmatprep.subr.mxu0 0.0
    %799 = vmatpush1.msra.mxu0 0.0
    %800 = vmatprep.subr.mxu0 0.0
    %801 = vmatpush1.msra.mxu0 %v164
    %802 = vmatprep.subr.mxu0 0.0
    %803 = vmatpush1.msra.mxu0 %v163
    %804 = vmatprep.subr.mxu0 0.0
    %805 = vmatpush1.msra.mxu0 %v162
    %806 = vmatprep.subr.mxu0 0.0
    %807 = vmatpush1.msra.mxu0 %v161
    %808 = vmatprep.subr.mxu0 0.0
    %809 = vmatpush2.msra.mxu0 0.0
    %810 = vmatprep.subr.mxu0 0.0
    %811 = vmatpush2.msra.mxu0 0.0
    %812 = vmatprep.subr.mxu0 0.0
    %813 = vmatpush2.msra.mxu0 0.0
    %814 = vmatprep.subr.mxu0 0.0
    %815 = vmatpush2.msra.mxu0 0.0
    %816 = vmatprep.subr.mxu0 0.0
    %817 = vmatpush2.msra.mxu0 0.0
    %818 = vmatprep.subr.mxu0 0.0
    %819 = vmatpush2.msra.mxu0 0.0
    %820 = vmatprep.subr.mxu0 0.0
    %821 = vmatpush2.msra.mxu0 0.0
    %822 = vmatprep.subr.mxu0 0.0
    %823 = vmatpush2.msra.mxu0 0.0
    %824 = vmatprep.subr.mxu0 0.0
    %825 = vmatpush2.msra.mxu0 0.0
    %826 = vmatprep.subr.mxu0 0.0
    %827 = vmatpush2.msra.mxu0 0.0
    %828 = vmatprep.subr.mxu0 0.0
    %829 = vmatpush2.msra.mxu0 0.0
    %830 = vmatprep.subr.mxu0 0.0
    %831 = vmatpush2.msra.mxu0 0.0
    %832 = vmatprep.subr.mxu0 0.0
    %833 = vmatpush2.msra.mxu0 0.0
    %834 = vmatprep.subr.mxu0 0.0
    %835 = vmatpush2.msra.mxu0 0.0
    %836 = vmatprep.subr.mxu0 0.0
    %837 = vmatpush2.msra.mxu0 0.0
    %838 = vmatprep.subr.mxu0 0.0
    %839 = vmatpush2.msra.mxu0 0.0
    %840 = vmatprep.mubr.f32.mxu0 0.0
    %841 = vmatmul.mubr.f32.gmra.mxu0 %v774
    %v842 = vpop.f32.mrf.mxu0
    %v843 = vadd.f32 %v772, %v842
    %v844 = vpop.f32.mrf.mxu0
    %845 = vdwg.mxu0
    %v846 = vxor.u32 %v843, 2147483648
    %v847 = vmul.f32 %v846, 1.442695
    %v848 = vpow.pop %v847
    %v849 = vadd.f32 %v848, 1.0
    %v850 = vrcp.pop %v849
    %v851 = vmul.f32 1.0, %v850
    %v852 = vtanh.pop %v843
    %v853 = vmul.f32 %v851, %v762
    %855 = vrot.lane.b32.xlu0 %v852, 64
    %v856 = vpop.permute.xlu0 %855
    %v858 = vmul.f32 %v851, %v856
    %860 = vrot.lane.b32.xlu0 %v858, 32
    %v861 = vpop.permute.xlu0 %860
    %v863 = vadd.f32 %v853, %v861
    %v864 = vtanh.pop %v863
    %866 = vrot.lane.b32.xlu0 %v864, 64
    %v867 = vpop.permute.xlu0 %866
    %v869 = vmul.f32 %v851, %v867
    %871 = vrot.lane.b32.xlu0 %v869, 32
    %v872 = vpop.permute.xlu0 %871
    %v873 = vrot.slane %v158, 7
    %v875 = vsel %vm165, %v872, 0
    %877 = vmatprep.subr.mxu0 0.0
    %878 = vmatpush1.msra.mxu0 0.0
    %879 = vmatprep.subr.mxu0 0.0
    %880 = vmatpush1.msra.mxu0 0.0
    %881 = vmatprep.subr.mxu0 0.0
    %882 = vmatpush1.msra.mxu0 0.0
    %883 = vmatprep.subr.mxu0 0.0
    %884 = vmatpush1.msra.mxu0 0.0
    %885 = vmatprep.subr.mxu0 0.0
    %886 = vmatpush1.msra.mxu0 0.0
    %887 = vmatprep.subr.mxu0 0.0
    %888 = vmatpush1.msra.mxu0 0.0
    %889 = vmatprep.subr.mxu0 0.0
    %890 = vmatpush1.msra.mxu0 0.0
    %891 = vmatprep.subr.mxu0 0.0
    %892 = vmatpush1.msra.mxu0 0.0
    %893 = vmatprep.subr.mxu0 0.0
    %894 = vmatpush1.msra.mxu0 0.0
    %895 = vmatprep.subr.mxu0 0.0
    %896 = vmatpush1.msra.mxu0 0.0
    %897 = vmatprep.subr.mxu0 0.0
    %898 = vmatpush1.msra.mxu0 0.0
    %899 = vmatprep.subr.mxu0 0.0
    %900 = vmatpush1.msra.mxu0 0.0
    %901 = vmatprep.subr.mxu0 0.0
    %902 = vmatpush1.msra.mxu0 %v164
    %903 = vmatprep.subr.mxu0 0.0
    %904 = vmatpush1.msra.mxu0 %v163
    %905 = vmatprep.subr.mxu0 0.0
    %906 = vmatpush1.msra.mxu0 %v162
    %907 = vmatprep.subr.mxu0 0.0
    %908 = vmatpush1.msra.mxu0 %v161
    %909 = vmatprep.subr.mxu0 0.0
    %910 = vmatpush2.msra.mxu0 0.0
    %911 = vmatprep.subr.mxu0 0.0
    %912 = vmatpush2.msra.mxu0 0.0
    %913 = vmatprep.subr.mxu0 0.0
    %914 = vmatpush2.msra.mxu0 0.0
    %915 = vmatprep.subr.mxu0 0.0
    %916 = vmatpush2.msra.mxu0 0.0
    %917 = vmatprep.subr.mxu0 0.0
    %918 = vmatpush2.msra.mxu0 0.0
    %919 = vmatprep.subr.mxu0 0.0
    %920 = vmatpush2.msra.mxu0 0.0
    %921 = vmatprep.subr.mxu0 0.0
    %922 = vmatpush2.msra.mxu0 0.0
    %923 = vmatprep.subr.mxu0 0.0
    %924 = vmatpush2.msra.mxu0 0.0
    %925 = vmatprep.subr.mxu0 0.0
    %926 = vmatpush2.msra.mxu0 0.0
    %927 = vmatprep.subr.mxu0 0.0
    %928 = vmatpush2.msra.mxu0 0.0
    %929 = vmatprep.subr.mxu0 0.0
    %930 = vmatpush2.msra.mxu0 0.0
    %931 = vmatprep.subr.mxu0 0.0
    %932 = vmatpush2.msra.mxu0 0.0
    %933 = vmatprep.subr.mxu0 0.0
    %934 = vmatpush2.msra.mxu0 0.0
    %935 = vmatprep.subr.mxu0 0.0
    %936 = vmatpush2.msra.mxu0 0.0
    %937 = vmatprep.subr.mxu0 0.0
    %938 = vmatpush2.msra.mxu0 0.0
    %939 = vmatprep.subr.mxu0 0.0
    %940 = vmatpush2.msra.mxu0 0.0
    %941 = vmatprep.mubr.f32.mxu0 0.0
    %942 = vmatmul.mubr.f32.gmra.mxu0 %v875
    %v943 = vpop.f32.mrf.mxu0
    %v944 = vadd.f32 %v873, %v943
    %v945 = vpop.f32.mrf.mxu0
    %946 = vdwg.mxu0
    %v947 = vxor.u32 %v944, 2147483648
    %v948 = vmul.f32 %v947, 1.442695
    %v949 = vpow.pop %v948
    %v950 = vadd.f32 %v949, 1.0
    %v951 = vrcp.pop %v950
    %v952 = vmul.f32 1.0, %v951
    %v953 = vtanh.pop %v944
    %v954 = vmul.f32 %v952, %v863
    %956 = vrot.lane.b32.xlu0 %v953, 64
    %v957 = vpop.permute.xlu0 %956
    %v959 = vmul.f32 %v952, %v957
    %961 = vrot.lane.b32.xlu0 %v959, 32
    %v962 = vpop.permute.xlu0 %961
    %v964 = vadd.f32 %v954, %v962
    %v965 = vtanh.pop %v964
    %967 = vrot.lane.b32.xlu0 %v965, 64
    %v968 = vpop.permute.xlu0 %967
    %v970 = vmul.f32 %v952, %v968
    %v971 = vld [vmem:[#allocation8] sm:$0xff]
    %v972 = vld [vmem:[#allocation8 + $0x8] sm:$0xff]
    %v973 = vld [vmem:[#allocation8 + $0x10] sm:$0xff]
    %v974 = vld [vmem:[#allocation8 + $0x18] sm:$0xff]
    %v975 = vld [vmem:[%s5] sm:$0x1]
    %977 = vrot.lane.b32.xlu0 %v970, 32
    %v978 = vpop.permute.xlu0 %977
    %v979 = vsel %vm165, %v978, 0
    %981 = vmatprep.subr.mxu0 0.0
    %982 = vmatpush1.msra.mxu0 0.0
    %983 = vmatprep.subr.mxu0 0.0
    %984 = vmatpush1.msra.mxu0 0.0
    %985 = vmatprep.subr.mxu0 0.0
    %986 = vmatpush1.msra.mxu0 0.0
    %987 = vmatprep.subr.mxu0 0.0
    %988 = vmatpush1.msra.mxu0 0.0
    %989 = vmatprep.subr.mxu0 0.0
    %990 = vmatpush1.msra.mxu0 0.0
    %991 = vmatprep.subr.mxu0 0.0
    %992 = vmatpush1.msra.mxu0 0.0
    %993 = vmatprep.subr.mxu0 0.0
    %994 = vmatpush1.msra.mxu0 0.0
    %995 = vmatprep.subr.mxu0 0.0
    %996 = vmatpush1.msra.mxu0 0.0
    %997 = vmatprep.subr.mxu0 0.0
    %998 = vmatpush1.msra.mxu0 0.0
    %999 = vmatprep.subr.mxu0 0.0
    %1000 = vmatpush1.msra.mxu0 0.0
    %1001 = vmatprep.subr.mxu0 0.0
    %1002 = vmatpush1.msra.mxu0 0.0
    %1003 = vmatprep.subr.mxu0 0.0
    %1004 = vmatpush1.msra.mxu0 0.0
    %1005 = vmatprep.subr.mxu0 0.0
    %1006 = vmatpush1.msra.mxu0 %v974
    %1007 = vmatprep.subr.mxu0 0.0
    %1008 = vmatpush1.msra.mxu0 %v973
    %1009 = vmatprep.subr.mxu0 0.0
    %1010 = vmatpush1.msra.mxu0 %v972
    %1011 = vmatprep.subr.mxu0 0.0
    %1012 = vmatpush1.msra.mxu0 %v971
    %1013 = vmatprep.subr.mxu0 0.0
    %1014 = vmatpush2.msra.mxu0 0.0
    %1015 = vmatprep.subr.mxu0 0.0
    %1016 = vmatpush2.msra.mxu0 0.0
    %1017 = vmatprep.subr.mxu0 0.0
    %1018 = vmatpush2.msra.mxu0 0.0
    %1019 = vmatprep.subr.mxu0 0.0
    %1020 = vmatpush2.msra.mxu0 0.0
    %1021 = vmatprep.subr.mxu0 0.0
    %1022 = vmatpush2.msra.mxu0 0.0
    %1023 = vmatprep.subr.mxu0 0.0
    %1024 = vmatpush2.msra.mxu0 0.0
    %1025 = vmatprep.subr.mxu0 0.0
    %1026 = vmatpush2.msra.mxu0 0.0
    %1027 = vmatprep.subr.mxu0 0.0
    %1028 = vmatpush2.msra.mxu0 0.0
    %1029 = vmatprep.subr.mxu0 0.0
    %1030 = vmatpush2.msra.mxu0 0.0
    %1031 = vmatprep.subr.mxu0 0.0
    %1032 = vmatpush2.msra.mxu0 0.0
    %1033 = vmatprep.subr.mxu0 0.0
    %1034 = vmatpush2.msra.mxu0 0.0
    %1035 = vmatprep.subr.mxu0 0.0
    %1036 = vmatpush2.msra.mxu0 0.0
    %1037 = vmatprep.subr.mxu0 0.0
    %1038 = vmatpush2.msra.mxu0 0.0
    %1039 = vmatprep.subr.mxu0 0.0
    %1040 = vmatpush2.msra.mxu0 0.0
    %1041 = vmatprep.subr.mxu0 0.0
    %1042 = vmatpush2.msra.mxu0 0.0
    %1043 = vmatprep.subr.mxu0 0.0
    %1044 = vmatpush2.msra.mxu0 0.0
    %1045 = vmatprep.mubr.f32.mxu0 0.0
    %1046 = vmatmul.mubr.f32.gmra.mxu0 %v979
    %v1047 = vpop.f32.mrf.mxu0
    %v1048 = vadd.f32 %v975, %v1047
    %v1049 = vpop.f32.mrf.mxu0
    %1050 = vdwg.mxu0
    %1051 = vst [vmem:[#allocation10] sm:$0x1] %v1048
    // Predicated region
    $region42: #{tpu_custom_call.1} parent=1 // pred_check
      _
    $region43: #{tpu_custom_call.1} parent=1 // pred_check_branch
      %1053 = sbr.rel (0) target = $region45
    $region44: #{tpu_custom_call.1} parent=1 // pred_region
      %s1055 = ssub.s32 16, 16
      %1056 = vsyncadd [#allocation4], %s1055
      %s1058 = sshll.u32 [#allocation10], 4
      %s1059 = int_to_ptr.vmem [resolvable:$true] %s1058
      %1061 = dma.vmem_to_hbm [thread:$0]  %s1059, 16, %s6, [#allocation4]
    $region45: #{tpu_custom_call.1} parent=1 // pred_fallthru
      _
    // Predicated region
    $region46: #{tpu_custom_call.1} parent=1 // pred_check
      _
    $region47: #{tpu_custom_call.1} parent=1 // pred_check_branch
      %1063 = sbr.rel (0) target = $region49
    $region48: #{tpu_custom_call.1} parent=1 // pred_region
      %1064 = dma.done [#allocation4], 16
    $region49: #{tpu_custom_call.1} parent=1 // pred_fallthru
      _
    %1065 = vsyncpa [#allocation3], 1
    %1066 = vsyncpa [#allocation6], 1
    %1067 = vsyncpa [#allocation9], 1
    %1068 = vsyncpa [#allocation4], 1

</llo_original>
